<compile_context>
chip_gen: v7x
topology: tpu7x:2x2x1
jax: 0.10.0
libtpu: 0.0.40
codegen_flags: <defaults>
</compile_context>

<pallas_src>
import jax
import jax.numpy as jnp
from jax.experimental import pallas as pl
from jax.experimental.pallas import tpu as pltpu


def _round_up(x, m):
    return ((x + m - 1) // m) * m


def _choose_tile_n(n, k, itemsize, max_tile_n):
    # Sublane multiple for the packed dtype (8 f32 / 16 bf16 / 32 int8).
    mult = {4: 8, 2: 16, 1: 32}.get(itemsize, 8)
    # Keep the double-buffered x window well under the ~32 MiB scoped VMEM.
    budget = 12 * 1024 * 1024
    cap = max(mult, (budget // (2 * k * itemsize)) // mult * mult)
    cap = min(cap, max_tile_n)
    return min(_round_up(n, mult), cap)


# ------------------------------------------------------------------
# One-time parameter re-layout (hoisted out of the per-call path)
# ------------------------------------------------------------------
def prepare_readout_params(params, compute_dtype):
    """Fuse / re-lay-out the NodeInvariantReadout weights.

    Call once per parameter set and reuse — for small inference graphs the
    handful of pad/transpose/concat ops here would otherwise rival the kernel.
    """
    w = params["w"]                       # [R-1, C, O] per-residue Linear weights
    r_minus_1, c, o = w.shape
    r = r_minus_1 + 1
    h = params["w1"].shape[-1]
    k = c * r

    # Fuse the R-1 per-residue heads into [K, O]; last-residue rows are zero.
    w_heads = jnp.pad(jnp.transpose(w, (1, 0, 2)), ((0, 0), (0, 1), (0, 0)))
    w_heads = w_heads.reshape(k, o)

    # Scatter the MLP first layer into the same residue-fastest layout (only
    # the last-residue rows are non-zero).
    w1_full = (jnp.zeros((c, r, h), params["w1"].dtype)
               .at[:, r - 1, :].set(params["w1"]).reshape(k, h))

    # Single fused operand [K, H+O] (MLP columns first), one fused bias row,
    # and an extended second layer [w2 ; I_O] so head columns pass through.
    # NOTE: casting weights to the compute dtype (e.g. bf16) is a deliberate
    # accuracy decision; accumulation stays f32 in-kernel.
    w_cat = jnp.concatenate([w1_full, w_heads], axis=1).astype(compute_dtype)
    b_head = params["b"].sum(axis=0, keepdims=True) + params["b2"]        # [1, O]
    b_cat = jnp.concatenate(
        [params["b1"].astype(jnp.float32), b_head.astype(jnp.float32)], axis=1)
    w2e = jnp.concatenate(
        [params["w2"], jnp.eye(o, dtype=params["w2"].dtype)], axis=0
    ).astype(compute_dtype)
    return {"w_cat": w_cat, "b_cat": b_cat, "w2e": w2e}


# ------------------------------------------------------------------
# Pallas kernel: NodeInvariantReadout forward (fully fused)
# ------------------------------------------------------------------
def _readout_kernel(x_ref, wcat_ref, bcat_ref, w2e_ref, o_ref):
    # x_ref   : [tN, K]     flattened embedding tile (K = C*R, residue-fastest)
    # wcat_ref: [K, H+O]    [w1 (MLP layer 1) | fused per-residue heads]
    # bcat_ref: [1, H+O]    [b1 | sum(head biases) + b2]
    # w2e_ref : [H+O, O]    [w2 ; I_O] (head columns pass through unscaled)
    # o_ref   : [tN, O]
    h_dim = w2e_ref.shape[0] - o_ref.shape[1]

    # One MXU pass over K covers all R-1 linear heads AND the MLP first layer.
    y = jnp.dot(x_ref[...], wcat_ref[...], preferred_element_type=jnp.float32)
    y = y + bcat_ref[...]

    # SiLU only on the MLP columns (iota mask -> no lane slicing / relayout).
    col = jax.lax.broadcasted_iota(jnp.int32, y.shape, dimension=1)
    act = jnp.where(col < h_dim, y * jax.nn.sigmoid(y), y)

    # Tiny second matmul: MLP layer 2 + pass-through of the head columns.
    acc = jnp.dot(act.astype(w2e_ref.dtype), w2e_ref[...],
                  preferred_element_type=jnp.float32)
    o_ref[...] = acc.astype(o_ref.dtype)


def node_invariant_readout(embedding_0, params=None, *, prepared=None,
                           max_tile_n=8192):
    """NodeInvariantReadout.forward.  embedding_0: [N, C, 1, R].

    Returns [N] when out_channels == 1 (torch .squeeze(-1)), else [N, O].
    """
    n, c, one, r = embedding_0.shape
    assert one == 1
    if prepared is None:
        prepared = prepare_readout_params(params, embedding_0.dtype)
    w_cat, b_cat, w2e = prepared["w_cat"], prepared["b_cat"], prepared["w2e"]
    k, ho = w_cat.shape
    o_dim = w2e.shape[1]
    h_dim = ho - o_dim
    assert k == c * r, "prepared params do not match embedding shape"

    # [N, C, 1, R] -> [N, C*R]: contiguous reshape (channel-major,
    # residue-fastest) — no transpose, no copy, dtype preserved.
    x = embedding_0.reshape(n, k)

    itemsize = jnp.dtype(x.dtype).itemsize
    tile_n = _choose_tile_n(n, k, itemsize, max_tile_n)
    grid = (pl.cdiv(n, tile_n),)

    w_itemsize = jnp.dtype(w_cat.dtype).itemsize
    flops = 2 * n * (k * ho + ho * o_dim)
    bytes_accessed = (n * k * itemsize
                      + (k * ho + ho * o_dim + ho) * w_itemsize
                      + n * o_dim * 4)
    cost = pl.CostEstimate(flops=int(flops), transcendentals=int(n * ho),
                           bytes_accessed=int(bytes_accessed))

    out = pl.pallas_call(
        _readout_kernel,
        out_shape=jax.ShapeDtypeStruct((n, o_dim), jnp.float32),
        grid_spec=pltpu.PrefetchScalarGridSpec(
            num_scalar_prefetch=0,
            grid=grid,
            in_specs=[
                pl.BlockSpec((tile_n, k), lambda i: (i, 0)),               # x tile
                pl.BlockSpec((k, ho), lambda i: (0, 0)),                   # fused W
                pl.BlockSpec((1, ho), lambda i: (0, 0)),                   # fused b
                pl.BlockSpec((h_dim + o_dim, o_dim), lambda i: (0, 0)),    # [w2; I]
            ],
            out_specs=pl.BlockSpec((tile_n, o_dim), lambda i: (i, 0)),
        ),
        compiler_params=pltpu.CompilerParams(dimension_semantics=("parallel",)),
        cost_estimate=cost,
    )(x, w_cat, b_cat, w2e)

    # torch: stack(...).sum(0).squeeze(-1) — squeeze only when O == 1.
    return out[:, 0] if o_dim == 1 else out


# ------------------------------------------------------------------
# PosEGNN energy head (compute_properties, energy path) — plain-JAX glue
# ------------------------------------------------------------------
def posegnn_energy(embedding_0, z, batch, num_graphs, params=None, buffers=None,
                   prepared=None):
    # TODO(synk): GotenNet encoder / BatchedPeriodicDistance / autograd force &
    # stress are not part of the provided source; only the readout + energy
    # aggregation of compute_properties are implemented here.
    node_e_res = node_invariant_readout(embedding_0, params, prepared=prepared)
    node_e_res = (node_e_res * buffers["atomic_res_total_std"]
                  + buffers["atomic_res_total_mean"])
    total_e_res = jax.ops.segment_sum(node_e_res, batch, num_segments=num_graphs)
    node_e0 = buffers["e0_mean"][z]
    total_e0 = jax.ops.segment_sum(node_e0, batch, num_segments=num_graphs)
    return total_e0 + total_e_res, node_e_res


# ------------------------------------------------------------------
# Deterministic parameter init (shapes from NodeInvariantReadout.__init__)
# ------------------------------------------------------------------
def init_params(key, in_channels, num_residues, hidden_channels, out_channels):
    ks = jax.random.split(key, 7)
    scale = 1.0 / jnp.sqrt(in_channels)
    scale_h = 1.0 / jnp.sqrt(hidden_channels)
    return {
        # stacked per-residue Linear(in_channels, out_channels), R-1 of them
        "w": jax.random.uniform(ks[0], (num_residues - 1, in_channels, out_channels),
                                jnp.float32, -scale, scale),
        "b": jax.random.uniform(ks[1], (num_residues - 1, out_channels),
                                jnp.float32, -scale, scale),
        # non_linear: Linear(in, hidden) -> SiLU -> Linear(hidden, out)
        "w1": jax.random.uniform(ks[2], (in_channels, hidden_channels),
                                 jnp.float32, -scale, scale),
        "b1": jax.random.uniform(ks[3], (1, hidden_channels),
                                 jnp.float32, -scale, scale),
        "w2": jax.random.uniform(ks[4], (hidden_channels, out_channels),
                                 jnp.float32, -scale_h, scale_h),
        "b2": jax.random.uniform(ks[5], (1, out_channels),
                                 jnp.float32, -scale_h, scale_h),
    }


# ------------------------------------------------------------------
# Pure-JAX reference of the torch readout (for a sanity check)
# ------------------------------------------------------------------
def readout_ref(embedding_0, p):
    x = embedding_0[:, :, 0, :]  # [N, C, R]
    r = x.shape[-1]
    outs = []
    for i in range(r - 1):
        outs.append(x[:, :, i] @ p["w"][i] + p["b"][i])
    h = x[:, :, -1] @ p["w1"] + p["b1"]
    h = h * jax.nn.sigmoid(h)
    outs.append(h @ p["w2"] + p["b2"])
    return jnp.stack(outs, 0).sum(0)[:, 0]


if __name__ == "__main__":
    key = jax.random.PRNGKey(0)
    k_emb, k_param, k_e0, k_big = jax.random.split(key, 4)

    # small, module-consistent shapes
    num_nodes = 8          # N atoms
    in_channels = 32       # encoder hidden size  -> K = C*R = 128 (lane-dense)
    num_residues = 4       # residue axis of embedding_0
    hidden_channels = 32
    out_channels = 1
    num_graphs = 2
    num_species = 10

    # synthetic encoder output: embedding_0 [N, C, 1, R]
    embedding_0 = jax.random.normal(
        k_emb, (num_nodes, in_channels, 1, num_residues), jnp.float32)
    z = jnp.array([1, 6, 6, 8, 1, 7, 6, 8], dtype=jnp.int32)
    batch = jnp.array([0, 0, 0, 0, 1, 1, 1, 1], dtype=jnp.int32)

    params = init_params(k_param, in_channels, num_residues, hidden_channels,
                         out_channels)
    buffers = {
        "e0_mean": jax.random.normal(k_e0, (num_species,), jnp.float32),
        "atomic_res_total_mean": jnp.float32(0.1),
        "atomic_res_total_std": jnp.float32(2.0),
    }

    # Hoist the weight re-layout out of the per-call path (runs once).
    prepared = prepare_readout_params(params, embedding_0.dtype)

    energy_fn = jax.jit(posegnn_energy, static_argnames=("num_graphs",))
    total_energy, node_e_res = energy_fn(
        embedding_0, z, batch, num_graphs=num_graphs, params=params,
        buffers=buffers, prepared=prepared)
    total_energy = jax.block_until_ready(total_energy)
    assert total_energy.shape == (num_graphs,)

    # correctness vs. a pure-JAX reference of the torch readout
    ref = readout_ref(embedding_0, params)
    got = node_invariant_readout(embedding_0, prepared=prepared)
    assert jnp.allclose(got, ref, atol=1e-4, rtol=1e-4), (got, ref)

    # larger node count: one big tile on single-TC chips, no wrapper pad copy
    n_big = 300
    emb_big = jax.random.normal(
        k_big, (n_big, in_channels, 1, num_residues), jnp.float32)
    got_big = jax.block_until_ready(
        node_invariant_readout(emb_big, prepared=prepared))
    ref_big = readout_ref(emb_big, params)
    assert jnp.allclose(got_big, ref_big, atol=1e-4, rtol=1e-4)

    # bf16 embeddings stay bf16 end-to-end (f32 accumulation); smoke check
    prepared_bf16 = prepare_readout_params(params, jnp.bfloat16)
    got_bf16 = jax.block_until_ready(
        node_invariant_readout(emb_big.astype(jnp.bfloat16),
                               prepared=prepared_bf16))
    assert got_bf16.shape == (n_big,)
    assert bool(jnp.all(jnp.isfinite(got_bf16)))

    print("KERNEL_OK")
</pallas_src>

<mosaic_0001>
module attributes {stable_mosaic.version = 11 : i64} {
  func.func @_readout_kernel(%arg0: i32, %arg1: memref<8x128xf32, #tpu.memory_space<vmem>>, %arg2: memref<128x33xf32, #tpu.memory_space<vmem>>, %arg3: memref<1x33xf32, #tpu.memory_space<vmem>>, %arg4: memref<33x1xf32, #tpu.memory_space<vmem>>, %arg5: memref<8x1xf32, #tpu.memory_space<vmem>>) attributes {dimension_semantics = [#tpu.dimension_semantics<parallel>], iteration_bounds = array<i64: 1>, scalar_prefetch = 0 : i64, scratch_operands = 0 : i64, tpu.core_type = #tpu.core_type<tc>, window_params = [{transform_indices = @transform_0, window_bounds = array<i64: 8, 128>}, {pipeline_mode = #tpu.pipeline_mode<synchronous>, transform_indices = @transform_1, window_bounds = array<i64: 128, 33>}, {pipeline_mode = #tpu.pipeline_mode<synchronous>, transform_indices = @transform_2, window_bounds = array<i64: 1, 33>}, {pipeline_mode = #tpu.pipeline_mode<synchronous>, transform_indices = @transform_3, window_bounds = array<i64: 33, 1>}, {transform_indices = @transform_4, window_bounds = array<i64: 8, 1>}]} {
    %c0 = arith.constant 0 : index
    %c0_0 = arith.constant 0 : index
    %0 = vector.load %arg1[%c0, %c0_0] : memref<8x128xf32, #tpu.memory_space<vmem>>, vector<8x128xf32>
    %c0_1 = arith.constant 0 : index
    %c0_2 = arith.constant 0 : index
    %1 = vector.load %arg2[%c0_1, %c0_2] : memref<128x33xf32, #tpu.memory_space<vmem>>, vector<128x33xf32>
    %cst = arith.constant dense<0.000000e+00> : vector<8x33xf32>
    %2 = tpu.matmul %0, %1, %cst {dimension_numbers = #tpu.dot_dimension_numbers<[1], [0], [0], [1], [0, 0, 1, 1], [], []>} : vector<8x128xf32>, vector<128x33xf32>, vector<8x33xf32> -> vector<8x33xf32>
    %c0_3 = arith.constant 0 : index
    %c0_4 = arith.constant 0 : index
    %3 = vector.load %arg3[%c0_3, %c0_4] : memref<1x33xf32, #tpu.memory_space<vmem>>, vector<1x33xf32>
    %4 = vector.broadcast %3 : vector<1x33xf32> to vector<8x33xf32>
    %5 = arith.addf %2, %4 : vector<8x33xf32>
    %6 = tpu.iota {dimensions = array<i32: 1>} : vector<8x33xi32>
    %c32_i32 = arith.constant 32 : i32
    %7 = vector.broadcast %c32_i32 : i32 to vector<8x33xi32>
    %8 = arith.cmpi slt, %6, %7 : vector<8x33xi32>
    %9 = arith.negf %5 : vector<8x33xf32>
    %10 = math.exp %9 : vector<8x33xf32>
    %cst_5 = arith.constant 1.000000e+00 : f32
    %11 = vector.broadcast %cst_5 : f32 to vector<8x33xf32>
    %12 = arith.addf %11, %10 : vector<8x33xf32>
    %13 = arith.divf %11, %12 : vector<8x33xf32>
    %14 = arith.mulf %5, %13 : vector<8x33xf32>
    %15 = arith.select %8, %14, %5 : vector<8x33xi1>, vector<8x33xf32>
    %c0_6 = arith.constant 0 : index
    %c0_7 = arith.constant 0 : index
    %16 = vector.load %arg4[%c0_6, %c0_7] : memref<33x1xf32, #tpu.memory_space<vmem>>, vector<33x1xf32>
    %cst_8 = arith.constant dense<0.000000e+00> : vector<8x1xf32>
    %17 = tpu.matmul %15, %16, %cst_8 {dimension_numbers = #tpu.dot_dimension_numbers<[1], [0], [0], [1], [0, 0, 1, 1], [], []>} : vector<8x33xf32>, vector<33x1xf32>, vector<8x1xf32> -> vector<8x1xf32>
    %c0_9 = arith.constant 0 : index
    %c0_10 = arith.constant 0 : index
    %18 = vector.load %arg5[%c0_9, %c0_10] : memref<8x1xf32, #tpu.memory_space<vmem>>, vector<8x1xf32>
    tpu.vector_store %arg5[%c0_9, %c0_10], %17 {strides = array<i32>} : memref<8x1xf32, #tpu.memory_space<vmem>>, vector<8x1xf32>,
    return
  }
  func.func @transform_0(%arg0: i32) -> (i32, i32) {
    %c0_i32 = arith.constant 0 : i32
    %c0_i32_0 = arith.constant 0 : i32
    return %arg0, %c0_i32 : i32, i32
  }
  func.func @transform_1(%arg0: i32) -> (i32, i32) {
    %c0_i32 = arith.constant 0 : i32
    %c0_i32_0 = arith.constant 0 : i32
    %c0_i32_1 = arith.constant 0 : i32
    return %c0_i32, %c0_i32_0 : i32, i32
  }
  func.func @transform_2(%arg0: i32) -> (i32, i32) {
    %c0_i32 = arith.constant 0 : i32
    %c0_i32_0 = arith.constant 0 : i32
    %c0_i32_1 = arith.constant 0 : i32
    return %c0_i32, %c0_i32_0 : i32, i32
  }
  func.func @transform_3(%arg0: i32) -> (i32, i32) {
    %c0_i32 = arith.constant 0 : i32
    %c0_i32_0 = arith.constant 0 : i32
    %c0_i32_1 = arith.constant 0 : i32
    return %c0_i32, %c0_i32_0 : i32, i32
  }
  func.func @transform_4(%arg0: i32) -> (i32, i32) {
    %c0_i32 = arith.constant 0 : i32
    %c0_i32_0 = arith.constant 0 : i32
    return %arg0, %c0_i32 : i32, i32
  }
}

</mosaic_0001>

<llo_original>
// kernel: posegnn_energy.1
$region0: #{posegnn_energy.1}
  #allocation0 [shape = 'u32[]', space=smem, size = 0x4, offset = 0x4, fixed_abs, tag = 'smem constant byte address 0x4 - core index']
  #allocation1 [shape = 'u32[144,128]{1,0:T(1,128)}', space=vmem, size = 0x12000, scoped, tag = 'internal scratch']
  %s0 = inlined_call_operand.vmem [shape: f32[8,128], index: 0, kind: input, shape index: {}]
  %s1 = inlined_call_operand.vmem [shape: f32[128,33], index: 1, kind: input, shape index: {}]
  %s2 = inlined_call_operand.vmem [shape: f32[1,33], index: 2, kind: input, shape index: {}]
  %s3 = inlined_call_operand.vmem [shape: f32[33,1], index: 3, kind: input, shape index: {}]
  %s4 = inlined_call_operand.vmem [shape: f32[8,1], index: 4, kind: output, shape index: {}]
  %s5 = sld [smem:[#allocation0]]
  $region26: #{posegnn_energy.1} parent=0
    _
  %s7 = ssub.s32 1, %s5
  %s8 = scalar_select 0, %s7, %s5
  // Predicated region
  $region2: #{posegnn_energy.1} parent=0 // pred_check
    _
  $region3: #{posegnn_energy.1} parent=0 // pred_check_branch
    %10 = sbr.rel (0) target = $region5
  $region4: #{posegnn_energy.1} parent=0 // pred_region
    _
  $region5: #{posegnn_energy.1} parent=0 // pred_fallthru
    _
  // Predicated region
  $region6: #{posegnn_energy.1} parent=0 // pred_check
    _
  $region7: #{posegnn_energy.1} parent=0 // pred_check_branch
    %12 = sbr.rel (0) target = $region9
  $region8: #{posegnn_energy.1} parent=0 // pred_region
    _
  $region9: #{posegnn_energy.1} parent=0 // pred_fallthru
    _
  // Predicated region
  $region10: #{posegnn_energy.1} parent=0 // pred_check
    _
  $region11: #{posegnn_energy.1} parent=0 // pred_check_branch
    %14 = sbr.rel (0) target = $region13
  $region12: #{posegnn_energy.1} parent=0 // pred_region
    _
  $region13: #{posegnn_energy.1} parent=0 // pred_fallthru
    _
  // Predicated region
  $region14: #{posegnn_energy.1} parent=0 // pred_check
    _
  $region15: #{posegnn_energy.1} parent=0 // pred_check_branch
    %16 = sbr.rel (0) target = $region17
  $region16: #{posegnn_energy.1} parent=0 // pred_region
    _
  $region17: #{posegnn_energy.1} parent=0 // pred_fallthru
    _
  %v17 = vld [vmem:[%s0] sm:$0xff]
  %v18 = vld [vmem:[%s1] sm:$0xff]
  %v19 = vld [vmem:[%s1 + $0x8] sm:$0xff]
  %v20 = vld [vmem:[%s1 + $0x10] sm:$0xff]
  %v21 = vld [vmem:[%s1 + $0x18] sm:$0xff]
  %v22 = vld [vmem:[%s1 + $0x20] sm:$0xff]
  %v23 = vld [vmem:[%s1 + $0x28] sm:$0xff]
  %v24 = vld [vmem:[%s1 + $0x30] sm:$0xff]
  %v25 = vld [vmem:[%s1 + $0x38] sm:$0xff]
  %v26 = vld [vmem:[%s1 + $0x40] sm:$0xff]
  %v27 = vld [vmem:[%s1 + $0x48] sm:$0xff]
  %v28 = vld [vmem:[%s1 + $0x50] sm:$0xff]
  %v29 = vld [vmem:[%s1 + $0x58] sm:$0xff]
  %v30 = vld [vmem:[%s1 + $0x60] sm:$0xff]
  %v31 = vld [vmem:[%s1 + $0x68] sm:$0xff]
  %v32 = vld [vmem:[%s1 + $0x70] sm:$0xff]
  %v33 = vld [vmem:[%s1 + $0x78] sm:$0xff]
  %v34 = vld [vmem:[%s2] sm:$0x1]
  %v36 = vlaneseq
  %v37 = vshrl.u32 %v36, 7
  %v38 = vsub.s32 0, %v37
  %v39 = vrot.slane %v34, %v38
  %41 = vmatprep.subr.mxu0 0.0
  %42 = vmatpush1.msra.mxu0 %v18
  %43 = vmatprep.subr.mxu0 0.0
  %44 = vmatpush1.msra.mxu0 %v19
  %45 = vmatprep.subr.mxu0 0.0
  %46 = vmatpush1.msra.mxu0 %v20
  %47 = vmatprep.subr.mxu0 0.0
  %48 = vmatpush1.msra.mxu0 %v21
  %49 = vmatprep.subr.mxu0 0.0
  %50 = vmatpush1.msra.mxu0 %v22
  %51 = vmatprep.subr.mxu0 0.0
  %52 = vmatpush1.msra.mxu0 %v23
  %53 = vmatprep.subr.mxu0 0.0
  %54 = vmatpush1.msra.mxu0 %v24
  %55 = vmatprep.subr.mxu0 0.0
  %56 = vmatpush1.msra.mxu0 %v25
  %57 = vmatprep.subr.mxu0 0.0
  %58 = vmatpush1.msra.mxu0 %v26
  %59 = vmatprep.subr.mxu0 0.0
  %60 = vmatpush1.msra.mxu0 %v27
  %61 = vmatprep.subr.mxu0 0.0
  %62 = vmatpush1.msra.mxu0 %v28
  %63 = vmatprep.subr.mxu0 0.0
  %64 = vmatpush1.msra.mxu0 %v29
  %65 = vmatprep.subr.mxu0 0.0
  %66 = vmatpush1.msra.mxu0 %v30
  %67 = vmatprep.subr.mxu0 0.0
  %68 = vmatpush1.msra.mxu0 %v31
  %69 = vmatprep.subr.mxu0 0.0
  %70 = vmatpush1.msra.mxu0 %v32
  %71 = vmatprep.subr.mxu0 0.0
  %72 = vmatpush1.msra.mxu0 %v33
  %73 = vmatprep.subr.mxu0 0.0
  %74 = vmatpush1.msra.mxu0 0.0
  %75 = vmatprep.subr.mxu0 0.0
  %76 = vmatpush1.msra.mxu0 0.0
  %77 = vmatprep.subr.mxu0 0.0
  %78 = vmatpush1.msra.mxu0 0.0
  %79 = vmatprep.subr.mxu0 0.0
  %80 = vmatpush1.msra.mxu0 0.0
  %81 = vmatprep.subr.mxu0 0.0
  %82 = vmatpush1.msra.mxu0 0.0
  %83 = vmatprep.subr.mxu0 0.0
  %84 = vmatpush1.msra.mxu0 0.0
  %85 = vmatprep.subr.mxu0 0.0
  %86 = vmatpush1.msra.mxu0 0.0
  %87 = vmatprep.subr.mxu0 0.0
  %88 = vmatpush1.msra.mxu0 0.0
  %89 = vmatprep.subr.mxu0 0.0
  %90 = vmatpush1.msra.mxu0 0.0
  %91 = vmatprep.subr.mxu0 0.0
  %92 = vmatpush1.msra.mxu0 0.0
  %93 = vmatprep.subr.mxu0 0.0
  %94 = vmatpush1.msra.mxu0 0.0
  %95 = vmatprep.subr.mxu0 0.0
  %96 = vmatpush1.msra.mxu0 0.0
  %97 = vmatprep.subr.mxu0 0.0
  %98 = vmatpush1.msra.mxu0 0.0
  %99 = vmatprep.subr.mxu0 0.0
  %100 = vmatpush1.msra.mxu0 0.0
  %101 = vmatprep.subr.mxu0 0.0
  %102 = vmatpush1.msra.mxu0 0.0
  %103 = vmatprep.subr.mxu0 0.0
  %104 = vmatpush1.msra.mxu0 0.0
  %105 = vmatprep.mubr.f32.mxu0 0.0
  %106 = vmatmul.mubr.f32.gmra.mrb[0].mxu0 %v17
  %v107 = vpop.f32.mrb[0].mxu0
  %v108 = vadd.f32 %v39, %v107
  %v109 = vpop.f32.mrb[0].mxu0
  %110 = vdwg.mxu0
  %v111 = vlaneseq
  %v112 = vand.u32 %v111, 127
  %vm113 = vcmp.lt.s32.totalorder %v112, 32
  %v114 = vxor.u32 %v108, 2147483648
  %v115 = vmul.f32 %v114, 1.442695
  %v116 = vpow.pop %v115
  %v117 = vadd.f32 %v116, 1.0
  %v118 = vrcp.pop %v117
  %v119 = vmul.f32 1.0, %v118
  %v120 = vmul.f32 %v108, %v119
  %v121 = vsel %vm113, %v120, %v108
  %v122 = vld [vmem:[%s3] sm:$0xff]
  %v123 = vld [vmem:[%s3 + $0x8] sm:$0xff]
  %v124 = vld [vmem:[%s3 + $0x10] sm:$0xff]
  %v125 = vld [vmem:[%s3 + $0x18] sm:$0xff]
  %v126 = vld [vmem:[%s3 + $0x20] sm:$0x1]
  %vm127 = vcmask 269312
  %v129 = vsel %vm127, %v121, 0
  %vm131 = vcmask 1040384
  %v133 = vsel %vm131, %v126, 0
  %135 = vmatprep.subr.mxu0 0.0
  %136 = vmatpush1.msra.mxu0 %v122
  %137 = vmatprep.subr.mxu0 0.0
  %138 = vmatpush1.msra.mxu0 %v123
  %139 = vmatprep.subr.mxu0 0.0
  %140 = vmatpush1.msra.mxu0 %v124
  %141 = vmatprep.subr.mxu0 0.0
  %142 = vmatpush1.msra.mxu0 %v125
  %143 = vmatprep.subr.mxu0 0.0
  %144 = vmatpush1.msra.mxu0 %v133
  %145 = vmatprep.subr.mxu0 0.0
  %146 = vmatpush1.msra.mxu0 0.0
  %147 = vmatprep.subr.mxu0 0.0
  %148 = vmatpush1.msra.mxu0 0.0
  %149 = vmatprep.subr.mxu0 0.0
  %150 = vmatpush1.msra.mxu0 0.0
  %151 = vmatprep.subr.mxu0 0.0
  %152 = vmatpush1.msra.mxu0 0.0
  %153 = vmatprep.subr.mxu0 0.0
  %154 = vmatpush1.msra.mxu0 0.0
  %155 = vmatprep.subr.mxu0 0.0
  %156 = vmatpush1.msra.mxu0 0.0
  %157 = vmatprep.subr.mxu0 0.0
  %158 = vmatpush1.msra.mxu0 0.0
  %159 = vmatprep.subr.mxu0 0.0
  %160 = vmatpush1.msra.mxu0 0.0
  %161 = vmatprep.subr.mxu0 0.0
  %162 = vmatpush1.msra.mxu0 0.0
  %163 = vmatprep.subr.mxu0 0.0
  %164 = vmatpush1.msra.mxu0 0.0
  %165 = vmatprep.subr.mxu0 0.0
  %166 = vmatpush1.msra.mxu0 0.0
  %167 = vmatprep.subr.mxu0 0.0
  %168 = vmatpush1.msra.mxu0 0.0
  %169 = vmatprep.subr.mxu0 0.0
  %170 = vmatpush1.msra.mxu0 0.0
  %171 = vmatprep.subr.mxu0 0.0
  %172 = vmatpush1.msra.mxu0 0.0
  %173 = vmatprep.subr.mxu0 0.0
  %174 = vmatpush1.msra.mxu0 0.0
  %175 = vmatprep.subr.mxu0 0.0
  %176 = vmatpush1.msra.mxu0 0.0
  %177 = vmatprep.subr.mxu0 0.0
  %178 = vmatpush1.msra.mxu0 0.0
  %179 = vmatprep.subr.mxu0 0.0
  %180 = vmatpush1.msra.mxu0 0.0
  %181 = vmatprep.subr.mxu0 0.0
  %182 = vmatpush1.msra.mxu0 0.0
  %183 = vmatprep.subr.mxu0 0.0
  %184 = vmatpush1.msra.mxu0 0.0
  %185 = vmatprep.subr.mxu0 0.0
  %186 = vmatpush1.msra.mxu0 0.0
  %187 = vmatprep.subr.mxu0 0.0
  %188 = vmatpush1.msra.mxu0 0.0
  %189 = vmatprep.subr.mxu0 0.0
  %190 = vmatpush1.msra.mxu0 0.0
  %191 = vmatprep.subr.mxu0 0.0
  %192 = vmatpush1.msra.mxu0 0.0
  %193 = vmatprep.subr.mxu0 0.0
  %194 = vmatpush1.msra.mxu0 0.0
  %195 = vmatprep.subr.mxu0 0.0
  %196 = vmatpush1.msra.mxu0 0.0
  %197 = vmatprep.subr.mxu0 0.0
  %198 = vmatpush1.msra.mxu0 0.0
  %199 = vmatprep.mubr.f32.mxu0 0.0
  %200 = vmatmul.mubr.f32.gmra.mrb[0].mxu0 %v129
  %v201 = vpop.f32.mrb[0].mxu0
  %v202 = vadd.f32 0.0, %v201
  %v203 = vpop.f32.mrb[0].mxu0
  %204 = vdwg.mxu0
  %vm205 = vcmask 7168
  %206 = vst.msk [vmem:[%s4] sm:$0xff] %vm205, %v202
  // Predicated region
  $region18: #{posegnn_energy.1} parent=0 // pred_check
    _
  $region19: #{posegnn_energy.1} parent=0 // pred_check_branch
    %208 = sbr.rel (0) target = $region21
  $region20: #{posegnn_energy.1} parent=0 // pred_region
    _
  $region21: #{posegnn_energy.1} parent=0 // pred_fallthru
    _
  // Predicated region
  $region22: #{posegnn_energy.1} parent=0 // pred_check
    _
  $region23: #{posegnn_energy.1} parent=0 // pred_check_branch
    %210 = sbr.rel (0) target = $region25
  $region24: #{posegnn_energy.1} parent=0 // pred_region
    _
  $region25: #{posegnn_energy.1} parent=0 // pred_fallthru
    _

</llo_original>
